<compile_context>
chip_gen: v6e
topology: v6e:2x2x1
jax: 0.10.0
libtpu: 0.0.40
codegen_flags: <defaults>
</compile_context>

<pallas_src>
import functools

import jax
import jax.numpy as jnp
from jax import lax
from jax.experimental import pallas as pl
from jax.experimental.pallas import tpu as pltpu

N_HIDDEN = 10
N_HEADS = 3
N_CLASSES = 2
VOCAB = 11

V_PAD = 16            # one-hot width: VOCAB + 1 bias column, padded to a bf16 row-tile
SLAB_ROWS = 32
SLAB_COLS = 128
TAIL_W_COL = 96       # slab cols [96, 98): fused tail weight  [3H, 2]
TAIL_B_COL = 98       # slab cols [98, 100): fused tail bias   [1, 2]


def attention_classifier_kernel(tokens_ref, slab_ref, out_ref, *, batch, seq):
  """Whole forward pass in one invocation; all operands resident in VMEM."""
  H, NH, V = N_HIDDEN, N_HEADS, VOCAB
  HH = NH * H
  B, S = batch, seq
  BS = B * S

  tokens = tokens_ref[...]                                    # [BS, 1] int32

  # One-hot over the vocab plus an always-on bias column (index V); columns
  # >= V+1 are padding (never set) so the RHS row-slice below stays tile-aligned.
  lane = lax.broadcasted_iota(jnp.int32, (BS, V_PAD), 1)
  onehot = jnp.logical_or(tokens == lane, lane == V).astype(jnp.bfloat16)

  # Embedding lookup + fused per-head Q/K/V projection (+ bias): ONE bf16 MXU
  # push.  Output columns >= 3H are unused garbage (tail weights share the slab).
  qkv = jnp.dot(onehot, slab_ref[0:V_PAD, :],
                preferred_element_type=jnp.float32)           # [BS, 128]
  q3 = qkv[:, 0:HH].reshape(B, S, HH)                         # [B, S, 3H]
  k3 = qkv[:, HH:2 * HH].reshape(B, S, HH)
  v3 = qkv[:, 2 * HH:3 * HH].reshape(B, S, HH)

  # Only each batch's CLS-token query matters downstream; broadcasting the
  # [B, 1, 3H] CLS row over the S key rows is a free sublane broadcast.
  prod = (q3[:, 0:1, :] * k3).reshape(BS, HH)                 # [BS, 3H]

  # Per-head scores, lane-expanded: one bf16 MXU push against an in-kernel
  # block-of-ones matrix (head(i) == head(j), built from iota + compares —
  # nothing shipped from HBM).  Every lane of a head carries that head's
  # scalar score, so the softmax stays fully lane-parallel and no
  # shrink-to-NH / expand-back matmuls are needed.
  i_iota = lax.broadcasted_iota(jnp.int32, (HH, HH), 0)
  j_iota = lax.broadcasted_iota(jnp.int32, (HH, HH), 1)
  i_head = sum((i_iota >= h * H).astype(jnp.int32) for h in range(1, NH))
  j_head = sum((j_iota >= h * H).astype(jnp.int32) for h in range(1, NH))
  head_ones = (i_head == j_head).astype(jnp.bfloat16)         # [3H, 3H]
  scores = jnp.dot(prod.astype(jnp.bfloat16), head_ones,
                   preferred_element_type=jnp.float32).reshape(B, S, HH)

  # Softmax over the S key rows of each batch, per head: per-batch per-head
  # max for stability, sublane-group reductions on the XLU (no MXU, no DMAs).
  m = jnp.max(scores, axis=1, keepdims=True)                  # [B, 1, 3H]
  e = jnp.exp(scores - m)                                     # [B, S, 3H]
  denom = jnp.sum(e, axis=1, keepdims=True)                   # [B, 1, 3H]
  p = e * pl.reciprocal(denom, approx=True)                   # attention probs (lane-expanded)

  # Context: weight V by the probs and reduce over the key rows; heads land
  # already concatenated on the lane axis (no jnp.concatenate).
  ctx = jnp.sum(p * v3, axis=1)                               # [B, 3H]

  # Fused tail (value-layer-again -> projection -> output), pre-multiplied
  # host-side into one [3H, 2] weight and one [1, 2] bias: one MXU push.
  w_tail = slab_ref[0:HH, TAIL_W_COL:TAIL_W_COL + N_CLASSES]  # [3H, 2] bf16
  b_tail = slab_ref[0:1, TAIL_B_COL:TAIL_B_COL + N_CLASSES].astype(jnp.float32)
  logits = jnp.dot(ctx.astype(jnp.bfloat16), w_tail,
                   preferred_element_type=jnp.float32) + b_tail  # [B, 2]

  # Class softmax with exact division; only the class-1 probability leaves.
  lm = jnp.max(logits, axis=-1, keepdims=True)
  le = jnp.exp(logits - lm)
  probs = le / jnp.sum(le, axis=-1, keepdims=True)
  out_ref[...] = probs[:, 1:2]                                # [B, 1]


def init_params(key, n_hidden=N_HIDDEN):
  """Deterministic synthetic parameters (not a checkpoint load)."""
  ks = jax.random.split(key, 12)
  s = 0.1
  H = n_hidden
  return {
      'emb': jax.random.normal(ks[0], (VOCAB, H), jnp.float32) * s,
      # Stacked per-head weights, already in [in, out] orientation.
      'wq': jax.random.normal(ks[1], (N_HEADS, H, H), jnp.float32) * s,
      'bq': jax.random.normal(ks[2], (N_HEADS, 1, H), jnp.float32) * s,
      'wk': jax.random.normal(ks[3], (N_HEADS, H, H), jnp.float32) * s,
      'bk': jax.random.normal(ks[4], (N_HEADS, 1, H), jnp.float32) * s,
      'wv': jax.random.normal(ks[5], (N_HEADS, H, H), jnp.float32) * s,
      'bv': jax.random.normal(ks[6], (N_HEADS, 1, H), jnp.float32) * s,
      'wp': jax.random.normal(ks[7], (N_HEADS * H, H), jnp.float32) * s,
      'bp': jax.random.normal(ks[8], (1, H), jnp.float32) * s,
      'wo': jax.random.normal(ks[9], (H, N_CLASSES), jnp.float32) * s,
      'bo': jax.random.normal(ks[10], (1, N_CLASSES), jnp.float32) * s,
  }


def _pack_params(params):
  """Fold embedding->QKV and the whole post-attention tail into one bf16 slab.

  Slab layout (bf16, [32, 128]):
    rows 0:V  , cols 0:9H   : emb_table @ [Wq | Wk | Wv]   (per-head column blocks)
    row  V    , cols 0:9H   : fused Q/K/V bias row
    rows 0:3H , cols 96:98  : W_tail = blockdiag(Wv) @ Wp @ Wo
    row  0    , cols 98:100 : b_tail = (bv @ Wp + bp) @ Wo + bo
  All fusions are computed in fp32 host-side; only the final cast is bf16.
  """
  H, NH, V = N_HIDDEN, N_HEADS, VOCAB
  HH = NH * H

  def heads_to_cols(w):   # [NH, H, H] -> [H, NH*H]; head h -> columns h*H:(h+1)*H
    return jnp.transpose(w, (1, 0, 2)).reshape(H, HH)

  def heads_to_row(b):    # [NH, 1, H] -> [1, NH*H]
    return b.reshape(1, HH)

  w_qkv = jnp.concatenate([heads_to_cols(params['wq']),
                           heads_to_cols(params['wk']),
                           heads_to_cols(params['wv'])], axis=1)          # [H, 9H]
  b_qkv = jnp.concatenate([heads_to_row(params['bq']),
                           heads_to_row(params['bk']),
                           heads_to_row(params['bv'])], axis=1)           # [1, 9H]
  table_fused = jnp.concatenate([params['emb'] @ w_qkv, b_qkv], axis=0)   # [V+1, 9H]

  # Block-diagonal "apply the value layer again" (off-blocks are exact zeros),
  # then collapse the parameter-only tail into a single weight + bias.
  w_vbd = jnp.zeros((HH, HH), jnp.float32)
  for h in range(NH):
    w_vbd = w_vbd.at[h * H:(h + 1) * H, h * H:(h + 1) * H].set(params['wv'][h])
  b_v = heads_to_row(params['bv'])                                        # [1, 3H]
  w_tail = w_vbd @ params['wp'] @ params['wo']                            # [3H, 2]
  b_tail = (b_v @ params['wp'] + params['bp']) @ params['wo'] + params['bo']  # [1, 2]

  slab = jnp.zeros((SLAB_ROWS, SLAB_COLS), jnp.float32)
  slab = slab.at[0:V + 1, 0:3 * HH].set(table_fused)
  slab = slab.at[0:HH, TAIL_W_COL:TAIL_W_COL + N_CLASSES].set(w_tail)
  slab = slab.at[0:1, TAIL_B_COL:TAIL_B_COL + N_CLASSES].set(b_tail)
  return slab.astype(jnp.bfloat16)


def neural_network_forward(tokens, params):
  """tokens: [B, S] int32 -> [B] float32 (probability of class 1)."""
  B, S = tokens.shape
  slab = _pack_params(params)
  tokens_flat = tokens.reshape(B * S, 1).astype(jnp.int32)

  vmem = pltpu.MemorySpace.VMEM
  kernel = functools.partial(attention_classifier_kernel, batch=B, seq=S)
  # Grid-less single invocation (2 input DMAs + 1 output DMA total).  If B
  # grows, add grid=(B,) with dimension_semantics=("parallel",) for v7x.
  out = pl.pallas_call(
      kernel,
      out_shape=jax.ShapeDtypeStruct((B, 1), jnp.float32),
      in_specs=[pl.BlockSpec(memory_space=vmem),
                pl.BlockSpec(memory_space=vmem)],
      out_specs=pl.BlockSpec(memory_space=vmem),
  )(tokens_flat, slab)
  return out[:, 0]


def reference_forward(tokens, params):
  """Pure-JAX mirror of the PyTorch module (fp32, for the self-check)."""
  emb = params['emb'][tokens]                                  # [B, S, H]
  heads = []
  for h in range(N_HEADS):
    q = emb @ params['wq'][h] + params['bq'][h]
    k = emb @ params['wk'][h] + params['bk'][h]
    v = emb @ params['wv'][h] + params['bv'][h]
    att = jnp.einsum('bqd,bkd->bqk', q, k)                     # no 1/sqrt(d), as in ref
    p = jax.nn.softmax(att, axis=-1)
    ctx = jnp.einsum('bqk,bkd->bqd', p, v)
    heads.append(ctx @ params['wv'][h] + params['bv'][h])      # value layer applied again
  concat = jnp.concatenate(heads, axis=-1)
  proj = concat @ params['wp'] + params['bp']
  logits = proj[:, 0, :] @ params['wo'] + params['bo']
  return jax.nn.softmax(logits, axis=-1)[:, 1]


if __name__ == "__main__":
  key = jax.random.PRNGKey(0)
  pkey, tkey = jax.random.split(key)
  params = init_params(pkey)

  B, S = 2, 8
  tokens = jax.random.randint(tkey, (B, S), 0, VOCAB, dtype=jnp.int32)

  probs = neural_network_forward(tokens, params)
  jax.block_until_ready(probs)

  assert probs.shape == (B,)
  assert bool(jnp.all(jnp.isfinite(probs)))

  # bf16 MXU operands + approx reciprocal on the attention denominator only;
  # exact division on the class softmax lets the tolerance tighten to 1e-2.
  ref = reference_forward(tokens, params)
  assert bool(jnp.allclose(probs, ref, atol=1e-2)), (probs, ref)

  print("KERNEL_OK")
</pallas_src>

<mosaic_0001>
module attributes {stable_mosaic.version = 11 : i64} {
  func.func @attention_classifier_kernel(%arg0: memref<16x1xi32, #tpu.memory_space<vmem>>, %arg1: memref<32x128xbf16, #tpu.memory_space<vmem>>, %arg2: memref<2x1xf32, #tpu.memory_space<vmem>>) attributes {dimension_semantics = [], scalar_prefetch = 0 : i64, scratch_operands = 0 : i64, tpu.core_type = #tpu.core_type<tc>} {
    %c0 = arith.constant 0 : index
    %c0_0 = arith.constant 0 : index
    %0 = vector.load %arg0[%c0, %c0_0] : memref<16x1xi32, #tpu.memory_space<vmem>>, vector<16x1xi32>
    %1 = tpu.iota {dimensions = array<i32: 1>} : vector<16x16xi32>
    %2 = vector.broadcast %0 : vector<16x1xi32> to vector<16x16xi32>
    %3 = arith.cmpi eq, %2, %1 : vector<16x16xi32>
    %c11_i32 = arith.constant 11 : i32
    %4 = vector.broadcast %c11_i32 : i32 to vector<16x16xi32>
    %5 = arith.cmpi eq, %1, %4 : vector<16x16xi32>
    %6 = arith.ori %3, %5 : vector<16x16xi1>
    %7 = arith.extui %6 : vector<16x16xi1> to vector<16x16xi32>
    %8 = arith.sitofp %7 : vector<16x16xi32> to vector<16x16xf32>
    %9 = arith.truncf %8 : vector<16x16xf32> to vector<16x16xbf16>
    %c0_1 = arith.constant 0 : index
    %c0_2 = arith.constant 0 : index
    %10 = vector.load %arg1[%c0_1, %c0_2] : memref<32x128xbf16, #tpu.memory_space<vmem>>, vector<16x128xbf16>
    %cst = arith.constant dense<0.000000e+00> : vector<16x128xf32>
    %11 = tpu.matmul %9, %10, %cst {dimension_numbers = #tpu.dot_dimension_numbers<[1], [0], [0], [1], [0, 0, 1, 1], [], []>} : vector<16x16xbf16>, vector<16x128xbf16>, vector<16x128xf32> -> vector<16x128xf32>
    %12 = vector.extract_strided_slice %11 {offsets = [0, 0], sizes = [16, 30], strides = [1, 1]} : vector<16x128xf32> to vector<16x30xf32>
    %13 = vector.shape_cast %12 : vector<16x30xf32> to vector<2x8x30xf32>
    %14 = vector.extract_strided_slice %11 {offsets = [0, 30], sizes = [16, 30], strides = [1, 1]} : vector<16x128xf32> to vector<16x30xf32>
    %15 = vector.shape_cast %14 : vector<16x30xf32> to vector<2x8x30xf32>
    %16 = vector.extract_strided_slice %11 {offsets = [0, 60], sizes = [16, 30], strides = [1, 1]} : vector<16x128xf32> to vector<16x30xf32>
    %17 = vector.shape_cast %16 : vector<16x30xf32> to vector<2x8x30xf32>
    %18 = vector.extract_strided_slice %13 {offsets = [0, 0, 0], sizes = [2, 1, 30], strides = [1, 1, 1]} : vector<2x8x30xf32> to vector<2x1x30xf32>
    %19 = vector.broadcast %18 : vector<2x1x30xf32> to vector<2x8x30xf32>
    %20 = arith.mulf %19, %15 : vector<2x8x30xf32>
    %21 = vector.shape_cast %20 : vector<2x8x30xf32> to vector<16x30xf32>
    %22 = tpu.iota {dimensions = array<i32: 0>} : vector<30x30xi32>
    %23 = tpu.iota {dimensions = array<i32: 1>} : vector<30x30xi32>
    %c10_i32 = arith.constant 10 : i32
    %24 = vector.broadcast %c10_i32 : i32 to vector<30x30xi32>
    %25 = arith.cmpi sge, %22, %24 : vector<30x30xi32>
    %26 = arith.extui %25 : vector<30x30xi1> to vector<30x30xi32>
    %c0_i32 = arith.constant 0 : i32
    %27 = vector.broadcast %c0_i32 : i32 to vector<30x30xi32>
    %28 = arith.addi %27, %26 : vector<30x30xi32>
    %c20_i32 = arith.constant 20 : i32
    %29 = vector.broadcast %c20_i32 : i32 to vector<30x30xi32>
    %30 = arith.cmpi sge, %22, %29 : vector<30x30xi32>
    %31 = arith.extui %30 : vector<30x30xi1> to vector<30x30xi32>
    %32 = arith.addi %28, %31 : vector<30x30xi32>
    %c10_i32_3 = arith.constant 10 : i32
    %33 = vector.broadcast %c10_i32_3 : i32 to vector<30x30xi32>
    %34 = arith.cmpi sge, %23, %33 : vector<30x30xi32>
    %35 = arith.extui %34 : vector<30x30xi1> to vector<30x30xi32>
    %c0_i32_4 = arith.constant 0 : i32
    %36 = vector.broadcast %c0_i32_4 : i32 to vector<30x30xi32>
    %37 = arith.addi %36, %35 : vector<30x30xi32>
    %c20_i32_5 = arith.constant 20 : i32
    %38 = vector.broadcast %c20_i32_5 : i32 to vector<30x30xi32>
    %39 = arith.cmpi sge, %23, %38 : vector<30x30xi32>
    %40 = arith.extui %39 : vector<30x30xi1> to vector<30x30xi32>
    %41 = arith.addi %37, %40 : vector<30x30xi32>
    %42 = arith.cmpi eq, %32, %41 : vector<30x30xi32>
    %43 = arith.extui %42 : vector<30x30xi1> to vector<30x30xi32>
    %44 = arith.sitofp %43 : vector<30x30xi32> to vector<30x30xf32>
    %45 = arith.truncf %44 : vector<30x30xf32> to vector<30x30xbf16>
    %46 = arith.truncf %21 : vector<16x30xf32> to vector<16x30xbf16>
    %cst_6 = arith.constant dense<0.000000e+00> : vector<16x30xf32>
    %47 = tpu.matmul %46, %45, %cst_6 {dimension_numbers = #tpu.dot_dimension_numbers<[1], [0], [0], [1], [0, 0, 1, 1], [], []>} : vector<16x30xbf16>, vector<30x30xbf16>, vector<16x30xf32> -> vector<16x30xf32>
    %48 = vector.shape_cast %47 : vector<16x30xf32> to vector<2x8x30xf32>
    %cst_7 = arith.constant dense<0xFF800000> : vector<2x30xf32>
    %49 = vector.multi_reduction <maximumf>, %48, %cst_7 [1] : vector<2x8x30xf32> to vector<2x30xf32>
    %50 = vector.shape_cast %49 : vector<2x30xf32> to vector<2x1x30xf32>
    %51 = vector.broadcast %50 : vector<2x1x30xf32> to vector<2x8x30xf32>
    %52 = arith.subf %48, %51 : vector<2x8x30xf32>
    %53 = math.exp %52 : vector<2x8x30xf32>
    %cst_8 = arith.constant dense<0.000000e+00> : vector<2x30xf32>
    %54 = vector.multi_reduction <add>, %53, %cst_8 [1] : vector<2x8x30xf32> to vector<2x30xf32>
    %55 = vector.shape_cast %54 : vector<2x30xf32> to vector<2x1x30xf32>
    %56 = tpu.reciprocal %55 {approx = true} : vector<2x1x30xf32> -> vector<2x1x30xf32>
    %57 = vector.broadcast %56 : vector<2x1x30xf32> to vector<2x8x30xf32>
    %58 = arith.mulf %53, %57 : vector<2x8x30xf32>
    %59 = arith.mulf %58, %17 : vector<2x8x30xf32>
    %cst_9 = arith.constant dense<0.000000e+00> : vector<2x30xf32>
    %60 = vector.multi_reduction <add>, %59, %cst_9 [1] : vector<2x8x30xf32> to vector<2x30xf32>
    %c0_10 = arith.constant 0 : index
    %c96 = arith.constant 96 : index
    %61 = vector.load %arg1[%c0_10, %c96] : memref<32x128xbf16, #tpu.memory_space<vmem>>, vector<30x2xbf16>
    %c0_11 = arith.constant 0 : index
    %c98 = arith.constant 98 : index
    %62 = vector.load %arg1[%c0_11, %c98] : memref<32x128xbf16, #tpu.memory_space<vmem>>, vector<1x2xbf16>
    %63 = arith.extf %62 : vector<1x2xbf16> to vector<1x2xf32>
    %64 = arith.truncf %60 : vector<2x30xf32> to vector<2x30xbf16>
    %cst_12 = arith.constant dense<0.000000e+00> : vector<2x2xf32>
    %65 = tpu.matmul %64, %61, %cst_12 {dimension_numbers = #tpu.dot_dimension_numbers<[1], [0], [0], [1], [0, 0, 1, 1], [], []>} : vector<2x30xbf16>, vector<30x2xbf16>, vector<2x2xf32> -> vector<2x2xf32>
    %66 = vector.broadcast %63 : vector<1x2xf32> to vector<2x2xf32>
    %67 = arith.addf %65, %66 : vector<2x2xf32>
    %cst_13 = arith.constant dense<0xFF800000> : vector<2xf32>
    %68 = vector.multi_reduction <maximumf>, %67, %cst_13 [1] : vector<2x2xf32> to vector<2xf32>
    %69 = vector.shape_cast %68 : vector<2xf32> to vector<2x1xf32>
    %70 = vector.broadcast %69 : vector<2x1xf32> to vector<2x2xf32>
    %71 = arith.subf %67, %70 : vector<2x2xf32>
    %72 = math.exp %71 : vector<2x2xf32>
    %cst_14 = arith.constant dense<0.000000e+00> : vector<2xf32>
    %73 = vector.multi_reduction <add>, %72, %cst_14 [1] : vector<2x2xf32> to vector<2xf32>
    %74 = vector.shape_cast %73 : vector<2xf32> to vector<2x1xf32>
    %75 = vector.broadcast %74 : vector<2x1xf32> to vector<2x2xf32>
    %76 = arith.divf %72, %75 : vector<2x2xf32>
    %77 = vector.extract_strided_slice %76 {offsets = [0, 1], sizes = [2, 1], strides = [1, 1]} : vector<2x2xf32> to vector<2x1xf32>
    %c0_15 = arith.constant 0 : index
    %c0_16 = arith.constant 0 : index
    %78 = vector.load %arg2[%c0_15, %c0_16] : memref<2x1xf32, #tpu.memory_space<vmem>>, vector<2x1xf32>
    tpu.vector_store %arg2[%c0_15, %c0_16], %77 {strides = array<i32>} : memref<2x1xf32, #tpu.memory_space<vmem>>, vector<2x1xf32>,
    return
  }
}

</mosaic_0001>

<llo_original>
// kernel: tpu_custom_call.1
$region0: #{tpu_custom_call.1}
  #allocation0 [shape = 'u32[]', space=smem, size = 0x4, offset = 0x4, fixed_abs, tag = 'smem constant byte address 0x4 - core index']
  #allocation1 [shape = 'u32[144,128]{1,0:T(1,128)}', space=vmem, size = 0x12000, scoped, tag = 'internal scratch']
  %s0 = inlined_call_operand.vmem [shape: s32[16,1], index: 0, kind: input, shape index: {}]
  %s1 = inlined_call_operand.vmem [shape: bf16[32,128], index: 1, kind: input, shape index: {}]
  %s2 = inlined_call_operand.vmem [shape: f32[2,1], index: 2, kind: output, shape index: {}]
  %s3 = sld [smem:[#allocation0]]
  $region18: #{tpu_custom_call.1} parent=0
    _
  %s5 = ssub.s32 1, %s3
  %s6 = scalar_select 0, %s5, %s3
  // Predicated region
  $region2: #{tpu_custom_call.1} parent=0 // pred_check
    _
  $region3: #{tpu_custom_call.1} parent=0 // pred_check_branch
    %8 = sbr.rel (0) target = $region5
  $region4: #{tpu_custom_call.1} parent=0 // pred_region
    _
  $region5: #{tpu_custom_call.1} parent=0 // pred_fallthru
    _
  // Predicated region
  $region6: #{tpu_custom_call.1} parent=0 // pred_check
    _
  $region7: #{tpu_custom_call.1} parent=0 // pred_check_branch
    %10 = sbr.rel (0) target = $region9
  $region8: #{tpu_custom_call.1} parent=0 // pred_region
    _
  $region9: #{tpu_custom_call.1} parent=0 // pred_fallthru
    _
  %v12 = vld [vmem:[%s0] sm:$0xff]
  %v13 = vld [vmem:[%s0 + $0x8] sm:$0xff]
  %v14 = vlaneseq
  %v15 = vand.u32 %v14, 127
  %16 = vset.pattern.permute.xlu0 0
  %17 = vperm.xlu0 %16, %v12
  %v18 = vpop.permute.xlu0 %17
  %19 = vset.pattern.permute.xlu0 0
  %20 = vperm.xlu0 %19, %v13
  %v21 = vpop.permute.xlu0 %20
  %vm22 = vcmp.eq.s32.totalorder %v18, %v15
  %vm23 = vcmp.eq.s32.totalorder %v21, %v15
  %vm24 = vcmp.eq.s32.totalorder %v15, 11
  %vm25 = vmor %vm22, %vm24
  %vm26 = vmor %vm23, %vm24
  %v27 = vsel %vm25, 1, 0
  %v28 = vsel %vm26, 1, 0
  %v29 = vcvt.s32.f32 %v27
  %v30 = vcvt.s32.f32 %v28
  %v31 = vpack.c.bf16 %v30, %v29
  %v32 = vld [vmem:[%s1] sm:$0xf]
  %v33 = vld [vmem:[%s1 + $0x4] sm:$0xf]
  %v36 = vunpack.c.l.b16 %v32
  %v37 = vunpack.c.l.b16 %v33
  %v38 = vpack.c.b16 %v37, %v36
  %vm40 = vcmask 130048
  %v42 = vsel %vm40, %v31, 0
  %44 = vmatprep.subr.bf16.mxu0 0
  %45 = vmatpush1.bf16.msra.mxu0 0
  %46 = vmatprep.subr.bf16.mxu0 0
  %47 = vmatpush1.bf16.msra.mxu0 0
  %48 = vmatprep.subr.bf16.mxu0 0
  %49 = vmatpush1.bf16.msra.mxu0 0
  %50 = vmatprep.subr.bf16.mxu0 0
  %51 = vmatpush1.bf16.msra.mxu0 0
  %52 = vmatprep.subr.bf16.mxu0 0
  %53 = vmatpush1.bf16.msra.mxu0 0
  %54 = vmatprep.subr.bf16.mxu0 0
  %55 = vmatpush1.bf16.msra.mxu0 0
  %56 = vmatprep.subr.bf16.mxu0 0
  %57 = vmatpush1.bf16.msra.mxu0 0
  %58 = vmatprep.subr.bf16.mxu0 0
  %59 = vmatpush1.bf16.msra.mxu0 %v38
  %60 = vmatprep.subr.bf16.mxu0 0
  %61 = vmatpush2.bf16.msra.mxu0 0
  %62 = vmatprep.subr.bf16.mxu0 0
  %63 = vmatpush2.bf16.msra.mxu0 0
  %64 = vmatprep.subr.bf16.mxu0 0
  %65 = vmatpush2.bf16.msra.mxu0 0
  %66 = vmatprep.subr.bf16.mxu0 0
  %67 = vmatpush2.bf16.msra.mxu0 0
  %68 = vmatprep.subr.bf16.mxu0 0
  %69 = vmatpush2.bf16.msra.mxu0 0
  %70 = vmatprep.subr.bf16.mxu0 0
  %71 = vmatpush2.bf16.msra.mxu0 0
  %72 = vmatprep.subr.bf16.mxu0 0
  %73 = vmatpush2.bf16.msra.mxu0 0
  %74 = vmatprep.subr.bf16.mxu0 0
  %75 = vmatpush2.bf16.msra.mxu0 0
  %76 = vmatprep.mubr.bf16.mxu0 0
  %77 = vmatmul.mubr.bf16.gmra.mxu0 %v42
  %v78 = vpop.f32.mrf.mxu0
  %v79 = vadd.f32 0.0, %v78
  %v80 = vpop.f32.mrf.mxu0
  %v81 = vpop.f32.mrf.mxu0
  %v82 = vadd.f32 0.0, %v81
  %v83 = vpop.f32.mrf.mxu0
  %84 = vdwg.mxu0
  %v85 = vlaneseq
  %v86 = vshrl.u32 %v85, 7
  %v87 = vsub.s32 0, %v86
  %v88 = vrot.slane %v79, %v87
  %v89 = vlaneseq
  %v90 = vshrl.u32 %v89, 7
  %v91 = vsub.s32 0, %v90
  %v92 = vrot.slane %v82, %v91
  %95 = vrot.lane.b32.xlu0 %v79, 98
  %v96 = vpop.permute.xlu0 %95
  %97 = vrot.lane.b32.xlu0 %v82, 98
  %v98 = vpop.permute.xlu0 %97
  %v101 = vmul.f32 %v88, %v96
  %v102 = vmul.f32 %v92, %v98
  %v103 = vlaneseq
  %v104 = vshrl.u32 %v103, 7
  %v105 = vadd.s32 %v104, 8
  %v106 = vadd.s32 %v104, 16
  %v107 = vadd.s32 %v104, 24
  %vm108 = vcmp.ge.s32.totalorder %v104, 10
  %vm109 = vcmp.ge.s32.totalorder %v105, 10
  %vm110 = vcmp.ge.s32.totalorder %v106, 10
  %vm111 = vcmp.ge.s32.totalorder %v107, 10
  %v112 = vsel %vm108, 1, 0
  %v113 = vsel %vm109, 1, 0
  %v114 = vsel %vm110, 1, 0
  %v115 = vsel %vm111, 1, 0
  %vm116 = vcmp.ge.s32.totalorder %v104, 20
  %vm117 = vcmp.ge.s32.totalorder %v105, 20
  %vm118 = vcmp.ge.s32.totalorder %v106, 20
  %vm119 = vcmp.ge.s32.totalorder %v107, 20
  %v120 = vsel %vm116, 1, 0
  %v121 = vsel %vm117, 1, 0
  %v122 = vsel %vm118, 1, 0
  %v123 = vsel %vm119, 1, 0
  %v124 = vadd.s32 %v112, %v120
  %v125 = vadd.s32 %v113, %v121
  %v126 = vadd.s32 %v114, %v122
  %v127 = vadd.s32 %v115, %v123
  %vm128 = vcmp.ge.s32.totalorder %v15, 10
  %v129 = vsel %vm128, 1, 0
  %vm130 = vcmp.ge.s32.totalorder %v15, 20
  %v131 = vsel %vm130, 1, 0
  %v132 = vadd.s32 %v129, %v131
  %vm133 = vcmp.eq.s32.totalorder %v124, %v132
  %vm134 = vcmp.eq.s32.totalorder %v125, %v132
  %vm135 = vcmp.eq.s32.totalorder %v126, %v132
  %vm136 = vcmp.eq.s32.totalorder %v127, %v132
  %v137 = vsel %vm133, 1, 0
  %v138 = vsel %vm134, 1, 0
  %v139 = vsel %vm135, 1, 0
  %v140 = vsel %vm136, 1, 0
  %v141 = vcvt.s32.f32 %v137
  %v142 = vcvt.s32.f32 %v138
  %v143 = vcvt.s32.f32 %v139
  %v144 = vcvt.s32.f32 %v140
  %v145 = vpack.c.bf16 %v142, %v141
  %v146 = vpack.c.bf16 %v144, %v143
  %v147 = vpack.c.bf16 %v102, %v101
  %vm148 = vcmask 244736
  %v150 = vsel %vm148, %v147, 0
  %vm152 = vcmask 1046528
  %v154 = vsel %vm152, %v146, 0
  %156 = vmatprep.subr.bf16.mxu0 0
  %157 = vmatpush1.bf16.msra.mxu0 0
  %158 = vmatprep.subr.bf16.mxu0 0
  %159 = vmatpush1.bf16.msra.mxu0 0
  %160 = vmatprep.subr.bf16.mxu0 0
  %161 = vmatpush1.bf16.msra.mxu0 0
  %162 = vmatprep.subr.bf16.mxu0 0
  %163 = vmatpush1.bf16.msra.mxu0 0
  %164 = vmatprep.subr.bf16.mxu0 0
  %165 = vmatpush1.bf16.msra.mxu0 0
  %166 = vmatprep.subr.bf16.mxu0 0
  %167 = vmatpush1.bf16.msra.mxu0 0
  %168 = vmatprep.subr.bf16.mxu0 0
  %169 = vmatpush1.bf16.msra.mxu0 %v154
  %170 = vmatprep.subr.bf16.mxu0 0
  %171 = vmatpush1.bf16.msra.mxu0 %v145
  %172 = vmatprep.subr.bf16.mxu0 0
  %173 = vmatpush2.bf16.msra.mxu0 0
  %174 = vmatprep.subr.bf16.mxu0 0
  %175 = vmatpush2.bf16.msra.mxu0 0
  %176 = vmatprep.subr.bf16.mxu0 0
  %177 = vmatpush2.bf16.msra.mxu0 0
  %178 = vmatprep.subr.bf16.mxu0 0
  %179 = vmatpush2.bf16.msra.mxu0 0
  %180 = vmatprep.subr.bf16.mxu0 0
  %181 = vmatpush2.bf16.msra.mxu0 0
  %182 = vmatprep.subr.bf16.mxu0 0
  %183 = vmatpush2.bf16.msra.mxu0 0
  %184 = vmatprep.subr.bf16.mxu0 0
  %185 = vmatpush2.bf16.msra.mxu0 0
  %186 = vmatprep.subr.bf16.mxu0 0
  %187 = vmatpush2.bf16.msra.mxu0 0
  %188 = vmatprep.mubr.bf16.mxu0 0
  %189 = vmatmul.mubr.bf16.gmra.mxu0 %v150
  %v190 = vpop.f32.mrf.mxu0
  %v191 = vadd.f32 0.0, %v190
  %v192 = vpop.f32.mrf.mxu0
  %v193 = vpop.f32.mrf.mxu0
  %v194 = vadd.f32 0.0, %v193
  %v195 = vpop.f32.mrf.mxu0
  %196 = vdwg.mxu0
  %v197 = vsel %vm148, %v191, -inf
  %v198 = vrot.slane %v197, 4
  %v199 = vmax.f32 %v197, %v198
  %v200 = vrot.slane %v199, 2
  %v201 = vmax.f32 %v199, %v200
  %v202 = vrot.slane %v201, 1
  %v203 = vmax.f32 %v201, %v202
  %v204 = vsel %vm148, %v194, -inf
  %v205 = vrot.slane %v204, 4
  %v206 = vmax.f32 %v204, %v205
  %v207 = vrot.slane %v206, 2
  %v208 = vmax.f32 %v206, %v207
  %v209 = vrot.slane %v208, 1
  %v210 = vmax.f32 %v208, %v209
  %v211 = vsub.f32 %v191, %v203
  %v212 = vsub.f32 %v194, %v210
  %v213 = vmul.f32 %v211, 1.442695
  %v214 = vpow.pop %v213
  %v215 = vmul.f32 %v212, 1.442695
  %v216 = vpow.pop %v215
  %v217 = vsel %vm148, %v214, 0.0
  %v218 = vrot.slane %v217, 4
  %v219 = vadd.f32 %v217, %v218
  %v220 = vrot.slane %v219, 2
  %v221 = vadd.f32 %v219, %v220
  %v222 = vrot.slane %v221, 1
  %v223 = vadd.f32 %v221, %v222
  %v224 = vsel %vm148, %v216, 0.0
  %v225 = vrot.slane %v224, 4
  %v226 = vadd.f32 %v224, %v225
  %v227 = vrot.slane %v226, 2
  %v228 = vadd.f32 %v226, %v227
  %v229 = vrot.slane %v228, 1
  %v230 = vadd.f32 %v228, %v229
  %v231 = vrcp.pop %v223
  %v232 = vrcp.pop %v230
  %v233 = vmul.f32 %v214, %v231
  %v234 = vmul.f32 %v216, %v232
  %235 = vrot.lane.b32.xlu0 %v79, 68
  %v236 = vpop.permute.xlu0 %235
  %237 = vrot.lane.b32.xlu0 %v82, 68
  %v238 = vpop.permute.xlu0 %237
  %v241 = vmul.f32 %v233, %v236
  %v242 = vmul.f32 %v234, %v238
  %v243 = vsel %vm148, %v241, 0.0
  %v244 = vrot.slane %v243, 4
  %v245 = vadd.f32 %v243, %v244
  %v246 = vrot.slane %v245, 2
  %v247 = vadd.f32 %v245, %v246
  %v248 = vrot.slane %v247, 1
  %v249 = vadd.f32 %v247, %v248
  %v250 = vsel %vm148, %v242, 0.0
  %v251 = vrot.slane %v250, 4
  %v252 = vadd.f32 %v250, %v251
  %v253 = vrot.slane %v252, 2
  %v254 = vadd.f32 %v252, %v253
  %v255 = vrot.slane %v254, 1
  %v256 = vadd.f32 %v254, %v255
  %v257 = vld [vmem:[%s1] sm:$0xf]
  %v258 = vld [vmem:[%s1 + $0x4] sm:$0xf]
  %v259 = vld [vmem:[%s1 + $0x8] sm:$0xf]
  %v260 = vld [vmem:[%s1 + $0xc] sm:$0x7]
  %v261 = vld [vmem:[%s1] sm:$0x1]
  %v262 = vunpack.c.l.bf16 %v261
  %v263 = vpack.c.bf16 %v249, %v249
  %v264 = vpack.c.bf16 %v256, %v256
  %v265 = vlaneseq
  %v266 = vshrl.u32 %v265, 7
  %v267 = vsub.s32 0, %v266
  %v268 = vrot.slane %v262, %v267
  %v271 = vunpack.c.l.b16 %v263
  %v272 = vunpack.c.l.b16 %v264
  %vm273 = vcmask 1041409
  %v274 = vsel %vm273, %v272, %v271
  %v275 = vpack.c.b16 %v274, %v274
  %v280 = vunpack.c.l.b16 %v257
  %v281 = vunpack.c.l.b16 %v258
  %v282 = vunpack.c.l.b16 %v259
  %v283 = vunpack.c.l.b16 %v260
  %v284 = vpack.c.b16 %v281, %v280
  %v285 = vpack.c.b16 %v283, %v282
  %286 = vrot.lane.b32.xlu0 %v284, 32
  %v287 = vpop.permute.xlu0 %286
  %288 = vrot.lane.b32.xlu0 %v285, 32
  %v289 = vpop.permute.xlu0 %288
  %292 = vrot.lane.b32.xlu0 %v268, 30
  %v293 = vpop.permute.xlu0 %292
  %v296 = vsel %vm148, %v275, 0
  %v299 = vsel %vm152, %v289, 0
  %301 = vmatprep.subr.bf16.mxu0 0
  %302 = vmatpush1.bf16.msra.mxu0 0
  %303 = vmatprep.subr.bf16.mxu0 0
  %304 = vmatpush1.bf16.msra.mxu0 0
  %305 = vmatprep.subr.bf16.mxu0 0
  %306 = vmatpush1.bf16.msra.mxu0 0
  %307 = vmatprep.subr.bf16.mxu0 0
  %308 = vmatpush1.bf16.msra.mxu0 0
  %309 = vmatprep.subr.bf16.mxu0 0
  %310 = vmatpush1.bf16.msra.mxu0 0
  %311 = vmatprep.subr.bf16.mxu0 0
  %312 = vmatpush1.bf16.msra.mxu0 0
  %313 = vmatprep.subr.bf16.mxu0 0
  %314 = vmatpush1.bf16.msra.mxu0 %v299
  %315 = vmatprep.subr.bf16.mxu0 0
  %316 = vmatpush1.bf16.msra.mxu0 %v287
  %317 = vmatprep.subr.bf16.mxu0 0
  %318 = vmatpush2.bf16.msra.mxu0 0
  %319 = vmatprep.subr.bf16.mxu0 0
  %320 = vmatpush2.bf16.msra.mxu0 0
  %321 = vmatprep.subr.bf16.mxu0 0
  %322 = vmatpush2.bf16.msra.mxu0 0
  %323 = vmatprep.subr.bf16.mxu0 0
  %324 = vmatpush2.bf16.msra.mxu0 0
  %325 = vmatprep.subr.bf16.mxu0 0
  %326 = vmatpush2.bf16.msra.mxu0 0
  %327 = vmatprep.subr.bf16.mxu0 0
  %328 = vmatpush2.bf16.msra.mxu0 0
  %329 = vmatprep.subr.bf16.mxu0 0
  %330 = vmatpush2.bf16.msra.mxu0 0
  %331 = vmatprep.subr.bf16.mxu0 0
  %332 = vmatpush2.bf16.msra.mxu0 0
  %333 = vmatprep.mubr.bf16.mxu0 0
  %334 = vmatmul.mubr.bf16.gmra.mxu0 %v296
  %v335 = vpop.f32.mrf.mxu0
  %v336 = vadd.f32 %v293, %v335
  %v337 = vpop.f32.mrf.mxu0
  %v338 = vpop.f32.mrf.mxu0
  %v339 = vpop.f32.mrf.mxu0
  %340 = vdwg.mxu0
  %vm341 = vcmask 9216
  %v342 = vsel %vm341, %v336, -inf
  %343 = vmax.xlane.f32.xlu0 %v342
  %v344 = vpop.xlane.xlu0 %343
  %v345 = vsub.f32 %v336, %v344
  %v346 = vmul.f32 %v345, 1.442695
  %v347 = vpow.pop %v346
  %v348 = vsel %vm341, %v347, 0.0
  %349 = vadd.xlane.f32.xlu0 %v348
  %v350 = vpop.xlane.xlu0 %349
  %v351 = vrcp.pop %v350
  %v352 = vmul.f32 %v347, %v351
  %354 = vrot.lane.b32.xlu0 %v352, 127
  %v355 = vpop.permute.xlu0 %354
  %vm357 = vcmask 1024
  %358 = vst.msk [vmem:[%s2] sm:$0x3] %vm357, %v355
  // Predicated region
  $region10: #{tpu_custom_call.1} parent=0 // pred_check
    _
  $region11: #{tpu_custom_call.1} parent=0 // pred_check_branch
    %360 = sbr.rel (0) target = $region13
  $region12: #{tpu_custom_call.1} parent=0 // pred_region
    _
  $region13: #{tpu_custom_call.1} parent=0 // pred_fallthru
    _
  // Predicated region
  $region14: #{tpu_custom_call.1} parent=0 // pred_check
    _
  $region15: #{tpu_custom_call.1} parent=0 // pred_check_branch
    %362 = sbr.rel (0) target = $region17
  $region16: #{tpu_custom_call.1} parent=0 // pred_region
    _
  $region17: #{tpu_custom_call.1} parent=0 // pred_fallthru
    _

</llo_original>
